<compile_context>
chip_gen: v7x
topology: tpu7x:2x2x1
jax: 0.10.0
libtpu: 0.0.40
codegen_flags: <defaults>
</compile_context>

<pallas_src>
import jax
import jax.numpy as jnp
from jax.experimental import pallas as pl
from jax.experimental.pallas import tpu as pltpu

# ---------------- problem sizes (small, consistent with the module) ---------
B = 8          # batch
D_IN = 32      # flat input features
D_COND = 4     # condition features
HIDDEN = 32    # MLP hidden width
LATENT = 8     # encoder.output_size == decoder.input_size
BETA = 0.01

# input-slab lane layout: [x (32) | cond (4) | 1 | pad (3) | eps (8)] -> 48
COND_SLOT = 8                       # padded condition+ones slot (>= D_COND+1)
ONE_COL = D_IN + D_COND             # 36: the ones column (folds eb1 / db1)
EPS_OFF = D_IN + COND_SLOT          # 40
IN_W = D_IN + COND_SLOT + LATENT    # 48 (multiple of 8)

# packed weight-slab layout, 64 lanes wide, row offsets multiples of 8
W_LANES = 2 * HIDDEN                # 64
ROW_W1 = 0                          # (IN_W, 64): [enc L1 (+eb1) | dec L1 cond (+db1)]
ROW_L2 = ROW_W1 + IN_W              # (HIDDEN, 64): [ew2 | wmu|wls head]
ROW_DW1Z = ROW_L2 + HIDDEN          # (LATENT, 64): [dw1z | 0]
ROW_L3 = ROW_DW1Z + LATENT          # (HIDDEN, 64): [dw2 | dw3]
W_ROWS = ROW_L3 + HIDDEN            # 120

# packed bias-slab lane layout (1, 128): lane-dense
B_EB2 = 0
B_HEAD = HIDDEN                     # [bmu (8) | bls (8) | 0...]
B_DB2 = 2 * HIDDEN
B_DB3 = 3 * HIDDEN
BIAS_W = 4 * HIDDEN                 # 128

# packed output-slab lane layout (B, 128)
O_XHAT = 0
O_MU = D_IN
O_LS = D_IN + LATENT
O_LAT = D_IN + 2 * LATENT
OUT_USED = D_IN + 3 * LATENT        # 56
OUT_W = 128


def vae_fwd_kernel(xin_ref, w_ref, b_ref, out_ref):
    xin = xin_ref[...]                              # (bm, 48) = [x|cond|1|pad|eps]
    b = b_ref[...]                                  # (1, 128) packed biases
    eps = xin[:, EPS_OFF:EPS_OFF + LATENT]          # (bm, 8)

    # ---- fused first matmul: [x,c,1] @ [encW1 | decW1c]  -> (bm, 64) --------
    # (eps lanes have zero weight rows, so they contribute nothing)
    f1 = jnp.dot(xin, w_ref[ROW_W1:ROW_W1 + IN_W, :],
                 preferred_element_type=jnp.float32)
    h = jnp.maximum(f1[:, 0:HIDDEN], 0.0)           # encoder layer-1 activation
    dcond = f1[:, HIDDEN:2 * HIDDEN]                # decoder layer-1 cond term (+db1)

    # ---- encoder layer 2 ----------------------------------------------------
    h = jnp.maximum(
        jnp.dot(h, w_ref[ROW_L2:ROW_L2 + HIDDEN, 0:HIDDEN],
                preferred_element_type=jnp.float32) + b[:, B_EB2:B_EB2 + HIDDEN],
        0.0)

    # ---- fused mu / log_std head: one matmul, static lane split -------------
    ml = jnp.dot(h, w_ref[ROW_L2:ROW_L2 + HIDDEN, HIDDEN:2 * HIDDEN],
                 preferred_element_type=jnp.float32) + b[:, B_HEAD:B_HEAD + HIDDEN]
    mu = ml[:, 0:LATENT]
    log_std = ml[:, LATENT:2 * LATENT]

    # ---- reparameterization: latent = eps * exp(log_std) + mu ---------------
    latent = eps * jnp.exp(log_std) + mu

    # ---- decoder ------------------------------------------------------------
    d = jnp.maximum(
        jnp.dot(latent, w_ref[ROW_DW1Z:ROW_DW1Z + LATENT, 0:HIDDEN],
                preferred_element_type=jnp.float32) + dcond,
        0.0)
    d = jnp.maximum(
        jnp.dot(d, w_ref[ROW_L3:ROW_L3 + HIDDEN, 0:HIDDEN],
                preferred_element_type=jnp.float32) + b[:, B_DB2:B_DB2 + HIDDEN],
        0.0)
    x_hat = jnp.dot(d, w_ref[ROW_L3:ROW_L3 + HIDDEN, HIDDEN:HIDDEN + D_IN],
                    preferred_element_type=jnp.float32) + b[:, B_DB3:B_DB3 + D_IN]

    # ---- single lane-dense output slab (one full-width store, one DMA) ------
    pad = jnp.zeros((x_hat.shape[0], OUT_W - OUT_USED), jnp.float32)
    out_ref[...] = jnp.concatenate([x_hat, mu, log_std, latent, pad], axis=-1)


def pack_params(p):
    """Pack the 16 raw parameter tensors into one weight slab + one bias slab."""
    f32 = jnp.float32
    # fused first-layer block: cols 0:32 encoder L1 (+eb1), cols 32:64 decoder
    # L1 condition part (+db1); eps / pad rows stay zero.
    w1 = jnp.zeros((IN_W, W_LANES), f32)
    w1 = w1.at[0:D_IN, 0:HIDDEN].set(p["ew1x"])
    w1 = w1.at[D_IN:D_IN + D_COND, 0:HIDDEN].set(p["ew1c"])
    w1 = w1.at[ONE_COL, 0:HIDDEN].set(p["eb1"][0])
    w1 = w1.at[D_IN:D_IN + D_COND, HIDDEN:2 * HIDDEN].set(p["dw1c"])
    w1 = w1.at[ONE_COL, HIDDEN:2 * HIDDEN].set(p["db1"][0])

    # encoder layer 2 | fused mu/log_std head (share a row block, lane split)
    w2 = jnp.zeros((HIDDEN, W_LANES), f32)
    w2 = w2.at[:, 0:HIDDEN].set(p["ew2"])
    w2 = w2.at[:, HIDDEN:HIDDEN + LATENT].set(p["wmu"])
    w2 = w2.at[:, HIDDEN + LATENT:HIDDEN + 2 * LATENT].set(p["wls"])

    # decoder layer 1 (latent part)
    w3 = jnp.zeros((LATENT, W_LANES), f32)
    w3 = w3.at[:, 0:HIDDEN].set(p["dw1z"])

    # decoder layer 2 | decoder output layer (share a row block, lane split)
    w4 = jnp.zeros((HIDDEN, W_LANES), f32)
    w4 = w4.at[:, 0:HIDDEN].set(p["dw2"])
    w4 = w4.at[:, HIDDEN:HIDDEN + D_IN].set(p["dw3"])

    w_pack = jnp.concatenate([w1, w2, w3, w4], axis=0)          # (120, 64)

    bhead = jnp.zeros((1, HIDDEN), f32)
    bhead = bhead.at[:, 0:LATENT].set(p["bmu"])
    bhead = bhead.at[:, LATENT:2 * LATENT].set(p["bls"])
    b_pack = jnp.concatenate([p["eb2"], bhead, p["db2"], p["db3"]], axis=1)

    return w_pack.astype(f32), b_pack.astype(f32)                # (120,64), (1,128)


def vae_forward(x, condition, eps, params):
    """Runs the fused VAE forward; returns (x_hat, mu, log_std, latent)."""
    batch = x.shape[0]
    bm = batch if batch <= 512 else 512          # batch tile (multiple of 8 for big B)
    grid = (pl.cdiv(batch, bm),)

    # host-side plumbing: [x | cond | 1 | pad | eps] activation slab + packed params
    xin = jnp.concatenate(
        [x.astype(jnp.float32),
         condition.astype(jnp.float32),
         jnp.ones((batch, 1), jnp.float32),
         jnp.zeros((batch, COND_SLOT - D_COND - 1), jnp.float32),
         eps.astype(jnp.float32)], axis=1)       # (batch, 48)
    w_pack, b_pack = pack_params(params)

    flops = 2 * batch * (IN_W * W_LANES + HIDDEN * HIDDEN + HIDDEN * HIDDEN
                         + LATENT * HIDDEN + HIDDEN * HIDDEN + HIDDEN * D_IN)
    bytes_accessed = 4 * (batch * IN_W + W_ROWS * W_LANES + BIAS_W
                          + batch * OUT_W)

    out = pl.pallas_call(
        vae_fwd_kernel,
        grid=grid,
        in_specs=[
            pl.BlockSpec((bm, IN_W), lambda i: (i, 0)),          # activation slab
            pl.BlockSpec((W_ROWS, W_LANES), lambda i: (0, 0)),   # packed weights
            pl.BlockSpec((1, BIAS_W), lambda i: (0, 0)),         # packed biases
        ],
        out_specs=pl.BlockSpec((bm, OUT_W), lambda i: (i, 0)),
        out_shape=jax.ShapeDtypeStruct((batch, OUT_W), jnp.float32),
        compiler_params=pltpu.CompilerParams(
            dimension_semantics=("parallel",),   # batch axis is independent
        ),
        cost_estimate=pl.CostEstimate(
            flops=flops,
            transcendentals=batch * LATENT,
            bytes_accessed=bytes_accessed,
        ),
    )(xin, w_pack, b_pack)

    x_hat = out[:, O_XHAT:O_XHAT + D_IN]
    mu = out[:, O_MU:O_MU + LATENT]
    log_std = out[:, O_LS:O_LS + LATENT]
    latent = out[:, O_LAT:O_LAT + LATENT]

    # x_hat = x_hat.view(x.size()) -- identity reshape here (both (B, D_IN))
    x_hat = jnp.reshape(x_hat, x.shape)
    return x_hat, mu, log_std, latent


def vae_loss(x, x_hat, mu, log_std, latent_size=LATENT, beta=BETA):
    # plain-JAX glue mirroring VariationalAutoencoder.loss
    restore_loss = jnp.mean((x_hat - x) ** 2)
    var = jnp.exp(log_std)
    kld = jnp.sum(-log_std + mu**2 * 0.5 + var, axis=1) - latent_size
    kl_loss = jnp.mean(kld)
    return restore_loss + beta * kl_loss, {
        "restore_loss": restore_loss,
        "kl_loss": kl_loss,
    }


def init_params(key):
    # deterministic normal_init_ analogue: weights ~ N(0, 0.1), biases = 0.
    ks = jax.random.split(key, 8)
    n = lambda k, shape: (0.1 * jax.random.normal(k, shape)).astype(jnp.float32)
    z = lambda shape: jnp.zeros(shape, jnp.float32)
    return {
        # encoder
        "ew1x": n(ks[0], (D_IN, HIDDEN)),
        "ew1c": n(ks[1], (D_COND, HIDDEN)),
        "eb1": z((1, HIDDEN)),
        "ew2": n(ks[2], (HIDDEN, HIDDEN)),
        "eb2": z((1, HIDDEN)),
        "wmu": n(ks[3], (HIDDEN, LATENT)),
        "bmu": z((1, LATENT)),
        "wls": n(ks[4], (HIDDEN, LATENT)),
        "bls": z((1, LATENT)),
        # decoder
        "dw1z": n(ks[5], (LATENT, HIDDEN)),
        "dw1c": n(ks[6], (D_COND, HIDDEN)),
        "db1": z((1, HIDDEN)),
        "dw2": n(ks[7], (HIDDEN, HIDDEN)),
        "db2": z((1, HIDDEN)),
        "dw3": n(jax.random.fold_in(key, 99), (HIDDEN, D_IN)),
        "db3": z((1, D_IN)),
    }


def _reference_forward(x, c, eps, p):
    # pure-JAX reference (unpacked params) for correctness check
    h = jnp.maximum(x @ p["ew1x"] + c @ p["ew1c"] + p["eb1"], 0.0)
    h = jnp.maximum(h @ p["ew2"] + p["eb2"], 0.0)
    mu = h @ p["wmu"] + p["bmu"]
    ls = h @ p["wls"] + p["bls"]
    z = eps * jnp.exp(ls) + mu
    d = jnp.maximum(z @ p["dw1z"] + c @ p["dw1c"] + p["db1"], 0.0)
    d = jnp.maximum(d @ p["dw2"] + p["db2"], 0.0)
    return d @ p["dw3"] + p["db3"], mu, ls, z


if __name__ == "__main__":
    key = jax.random.PRNGKey(0)
    k_x, k_c, k_eps, k_p = jax.random.split(key, 4)

    x = jax.random.normal(k_x, (B, D_IN), dtype=jnp.float32)
    condition = jax.random.normal(k_c, (B, D_COND), dtype=jnp.float32)
    # eps = torch.randn_like(var): sampled outside the kernel for determinism
    # TODO(synk): could use pltpu.prng_seed/prng_random_bits for in-kernel sampling.
    eps = jax.random.normal(k_eps, (B, LATENT), dtype=jnp.float32)
    params = init_params(k_p)

    x_hat, mu, log_std, latent = vae_forward(x, condition, eps, params)
    jax.block_until_ready((x_hat, mu, log_std, latent))

    # correctness check against pure-JAX reference
    ref = _reference_forward(x, condition, eps, params)
    for got, want in zip((x_hat, mu, log_std, latent), ref):
        assert jnp.allclose(got, want, atol=1e-5, rtol=1e-5)

    loss, info = vae_loss(x, x_hat, mu, log_std)
    jax.block_until_ready(loss)

    print("KERNEL_OK")
</pallas_src>

<mosaic_0001>
module attributes {stable_mosaic.version = 11 : i64} {
  func.func @vae_fwd_kernel(%arg0: i32, %arg1: memref<8x48xf32, #tpu.memory_space<vmem>>, %arg2: memref<120x64xf32, #tpu.memory_space<vmem>>, %arg3: memref<1x128xf32, #tpu.memory_space<vmem>>, %arg4: memref<8x128xf32, #tpu.memory_space<vmem>>) attributes {dimension_semantics = [#tpu.dimension_semantics<parallel>], iteration_bounds = array<i64: 1>, scalar_prefetch = 0 : i64, scratch_operands = 0 : i64, tpu.core_type = #tpu.core_type<tc>, window_params = [{transform_indices = @transform_0, window_bounds = array<i64: 8, 48>}, {pipeline_mode = #tpu.pipeline_mode<synchronous>, transform_indices = @transform_1, window_bounds = array<i64: 120, 64>}, {pipeline_mode = #tpu.pipeline_mode<synchronous>, transform_indices = @transform_2, window_bounds = array<i64: 1, 128>}, {transform_indices = @transform_3, window_bounds = array<i64: 8, 128>}]} {
    %c0 = arith.constant 0 : index
    %c0_0 = arith.constant 0 : index
    %0 = vector.load %arg1[%c0, %c0_0] : memref<8x48xf32, #tpu.memory_space<vmem>>, vector<8x48xf32>
    %c0_1 = arith.constant 0 : index
    %c0_2 = arith.constant 0 : index
    %1 = vector.load %arg3[%c0_1, %c0_2] : memref<1x128xf32, #tpu.memory_space<vmem>>, vector<1x128xf32>
    %2 = vector.extract_strided_slice %0 {offsets = [0, 40], sizes = [8, 8], strides = [1, 1]} : vector<8x48xf32> to vector<8x8xf32>
    %c0_3 = arith.constant 0 : index
    %c0_4 = arith.constant 0 : index
    %3 = vector.load %arg2[%c0_3, %c0_4] : memref<120x64xf32, #tpu.memory_space<vmem>>, vector<48x64xf32>
    %cst = arith.constant dense<0.000000e+00> : vector<8x64xf32>
    %4 = tpu.matmul %0, %3, %cst {dimension_numbers = #tpu.dot_dimension_numbers<[1], [0], [0], [1], [0, 0, 1, 1], [], []>} : vector<8x48xf32>, vector<48x64xf32>, vector<8x64xf32> -> vector<8x64xf32>
    %5 = vector.extract_strided_slice %4 {offsets = [0, 0], sizes = [8, 32], strides = [1, 1]} : vector<8x64xf32> to vector<8x32xf32>
    %cst_5 = arith.constant 0.000000e+00 : f32
    %6 = vector.broadcast %cst_5 : f32 to vector<8x32xf32>
    %7 = arith.maximumf %5, %6 : vector<8x32xf32>
    %8 = vector.extract_strided_slice %4 {offsets = [0, 32], sizes = [8, 32], strides = [1, 1]} : vector<8x64xf32> to vector<8x32xf32>
    %c48 = arith.constant 48 : index
    %c0_6 = arith.constant 0 : index
    %9 = vector.load %arg2[%c48, %c0_6] : memref<120x64xf32, #tpu.memory_space<vmem>>, vector<32x32xf32>
    %cst_7 = arith.constant dense<0.000000e+00> : vector<8x32xf32>
    %10 = tpu.matmul %7, %9, %cst_7 {dimension_numbers = #tpu.dot_dimension_numbers<[1], [0], [0], [1], [0, 0, 1, 1], [], []>} : vector<8x32xf32>, vector<32x32xf32>, vector<8x32xf32> -> vector<8x32xf32>
    %11 = vector.extract_strided_slice %1 {offsets = [0, 0], sizes = [1, 32], strides = [1, 1]} : vector<1x128xf32> to vector<1x32xf32>
    %12 = vector.broadcast %11 : vector<1x32xf32> to vector<8x32xf32>
    %13 = arith.addf %10, %12 : vector<8x32xf32>
    %cst_8 = arith.constant 0.000000e+00 : f32
    %14 = vector.broadcast %cst_8 : f32 to vector<8x32xf32>
    %15 = arith.maximumf %13, %14 : vector<8x32xf32>
    %c48_9 = arith.constant 48 : index
    %c32 = arith.constant 32 : index
    %16 = vector.load %arg2[%c48_9, %c32] : memref<120x64xf32, #tpu.memory_space<vmem>>, vector<32x32xf32>
    %cst_10 = arith.constant dense<0.000000e+00> : vector<8x32xf32>
    %17 = tpu.matmul %15, %16, %cst_10 {dimension_numbers = #tpu.dot_dimension_numbers<[1], [0], [0], [1], [0, 0, 1, 1], [], []>} : vector<8x32xf32>, vector<32x32xf32>, vector<8x32xf32> -> vector<8x32xf32>
    %18 = vector.extract_strided_slice %1 {offsets = [0, 32], sizes = [1, 32], strides = [1, 1]} : vector<1x128xf32> to vector<1x32xf32>
    %19 = vector.broadcast %18 : vector<1x32xf32> to vector<8x32xf32>
    %20 = arith.addf %17, %19 : vector<8x32xf32>
    %21 = vector.extract_strided_slice %20 {offsets = [0, 0], sizes = [8, 8], strides = [1, 1]} : vector<8x32xf32> to vector<8x8xf32>
    %22 = vector.extract_strided_slice %20 {offsets = [0, 8], sizes = [8, 8], strides = [1, 1]} : vector<8x32xf32> to vector<8x8xf32>
    %23 = math.exp %22 : vector<8x8xf32>
    %24 = arith.mulf %2, %23 : vector<8x8xf32>
    %25 = arith.addf %24, %21 : vector<8x8xf32>
    %c80 = arith.constant 80 : index
    %c0_11 = arith.constant 0 : index
    %26 = vector.load %arg2[%c80, %c0_11] : memref<120x64xf32, #tpu.memory_space<vmem>>, vector<8x32xf32>
    %cst_12 = arith.constant dense<0.000000e+00> : vector<8x32xf32>
    %27 = tpu.matmul %25, %26, %cst_12 {dimension_numbers = #tpu.dot_dimension_numbers<[1], [0], [0], [1], [0, 0, 1, 1], [], []>} : vector<8x8xf32>, vector<8x32xf32>, vector<8x32xf32> -> vector<8x32xf32>
    %28 = arith.addf %27, %8 : vector<8x32xf32>
    %cst_13 = arith.constant 0.000000e+00 : f32
    %29 = vector.broadcast %cst_13 : f32 to vector<8x32xf32>
    %30 = arith.maximumf %28, %29 : vector<8x32xf32>
    %c88 = arith.constant 88 : index
    %c0_14 = arith.constant 0 : index
    %31 = vector.load %arg2[%c88, %c0_14] : memref<120x64xf32, #tpu.memory_space<vmem>>, vector<32x32xf32>
    %cst_15 = arith.constant dense<0.000000e+00> : vector<8x32xf32>
    %32 = tpu.matmul %30, %31, %cst_15 {dimension_numbers = #tpu.dot_dimension_numbers<[1], [0], [0], [1], [0, 0, 1, 1], [], []>} : vector<8x32xf32>, vector<32x32xf32>, vector<8x32xf32> -> vector<8x32xf32>
    %33 = vector.extract_strided_slice %1 {offsets = [0, 64], sizes = [1, 32], strides = [1, 1]} : vector<1x128xf32> to vector<1x32xf32>
    %34 = vector.broadcast %33 : vector<1x32xf32> to vector<8x32xf32>
    %35 = arith.addf %32, %34 : vector<8x32xf32>
    %cst_16 = arith.constant 0.000000e+00 : f32
    %36 = vector.broadcast %cst_16 : f32 to vector<8x32xf32>
    %37 = arith.maximumf %35, %36 : vector<8x32xf32>
    %c88_17 = arith.constant 88 : index
    %c32_18 = arith.constant 32 : index
    %38 = vector.load %arg2[%c88_17, %c32_18] : memref<120x64xf32, #tpu.memory_space<vmem>>, vector<32x32xf32>
    %cst_19 = arith.constant dense<0.000000e+00> : vector<8x32xf32>
    %39 = tpu.matmul %37, %38, %cst_19 {dimension_numbers = #tpu.dot_dimension_numbers<[1], [0], [0], [1], [0, 0, 1, 1], [], []>} : vector<8x32xf32>, vector<32x32xf32>, vector<8x32xf32> -> vector<8x32xf32>
    %40 = vector.extract_strided_slice %1 {offsets = [0, 96], sizes = [1, 32], strides = [1, 1]} : vector<1x128xf32> to vector<1x32xf32>
    %41 = vector.broadcast %40 : vector<1x32xf32> to vector<8x32xf32>
    %42 = arith.addf %39, %41 : vector<8x32xf32>
    %cst_20 = arith.constant 0.000000e+00 : f32
    %43 = vector.broadcast %cst_20 : f32 to vector<8x72xf32>
    %44 = tpu.concatenate %42, %21, %22, %25, %43 in 1 : vector<8x32xf32>, vector<8x8xf32>, vector<8x8xf32>, vector<8x8xf32>, vector<8x72xf32> -> vector<8x128xf32>
    %c0_21 = arith.constant 0 : index
    %c0_22 = arith.constant 0 : index
    %45 = vector.load %arg4[%c0_21, %c0_22] : memref<8x128xf32, #tpu.memory_space<vmem>>, vector<8x128xf32>
    tpu.vector_store %arg4[%c0_21, %c0_22], %44 {strides = array<i32>} : memref<8x128xf32, #tpu.memory_space<vmem>>, vector<8x128xf32>,
    return
  }
  func.func @transform_0(%arg0: i32) -> (i32, i32) {
    %c0_i32 = arith.constant 0 : i32
    %c0_i32_0 = arith.constant 0 : i32
    return %arg0, %c0_i32 : i32, i32
  }
  func.func @transform_1(%arg0: i32) -> (i32, i32) {
    %c0_i32 = arith.constant 0 : i32
    %c0_i32_0 = arith.constant 0 : i32
    %c0_i32_1 = arith.constant 0 : i32
    return %c0_i32, %c0_i32_0 : i32, i32
  }
  func.func @transform_2(%arg0: i32) -> (i32, i32) {
    %c0_i32 = arith.constant 0 : i32
    %c0_i32_0 = arith.constant 0 : i32
    %c0_i32_1 = arith.constant 0 : i32
    return %c0_i32, %c0_i32_0 : i32, i32
  }
  func.func @transform_3(%arg0: i32) -> (i32, i32) {
    %c0_i32 = arith.constant 0 : i32
    %c0_i32_0 = arith.constant 0 : i32
    return %arg0, %c0_i32 : i32, i32
  }
}

</mosaic_0001>

<llo_original>
// kernel: tpu_custom_call.1
$region0: #{tpu_custom_call.1}
  #allocation0 [shape = 'u32[]', space=smem, size = 0x4, offset = 0x4, fixed_abs, tag = 'smem constant byte address 0x4 - core index']
  #allocation1 [shape = 'u32[144,128]{1,0:T(1,128)}', space=vmem, size = 0x12000, scoped, tag = 'internal scratch']
  %s0 = inlined_call_operand.vmem [shape: f32[8,48], index: 0, kind: input, shape index: {}]
  %s1 = inlined_call_operand.vmem [shape: f32[120,64], index: 1, kind: input, shape index: {}]
  %s2 = inlined_call_operand.vmem [shape: f32[1,128], index: 2, kind: input, shape index: {}]
  %s3 = inlined_call_operand.hbm [shape: f32[8,128], index: 3, kind: output, shape index: {}]
  %s4 = sld [smem:[#allocation0]]
  $region22: #{tpu_custom_call.1} parent=0
    _
  %s6 = ssub.s32 1, %s4
  %s7 = scalar_select 0, %s6, %s4
  $region1: #{tpu_custom_call.1} parent=0
    #allocation2 [shape = 'u8[4096]{0}', space=vmem, size = 0x1000, scoped, tag = 'output window, operand 0, single buffered']
    #allocation3 [shape = 's32[1]{0}', space=sflag, size = 0x4, scoped, tag = 'scoped memory for tpu_custom_call.1']
    %8 = vsyncpa [#allocation3], 0
    // Predicated region
    $region2: #{tpu_custom_call.1} parent=1 // pred_check
      _
    $region3: #{tpu_custom_call.1} parent=1 // pred_check_branch
      %10 = sbr.rel (0) target = $region5
    $region4: #{tpu_custom_call.1} parent=1 // pred_region
      _
    $region5: #{tpu_custom_call.1} parent=1 // pred_fallthru
      _
    // Predicated region
    $region6: #{tpu_custom_call.1} parent=1 // pred_check
      _
    $region7: #{tpu_custom_call.1} parent=1 // pred_check_branch
      %12 = sbr.rel (0) target = $region9
    $region8: #{tpu_custom_call.1} parent=1 // pred_region
      _
    $region9: #{tpu_custom_call.1} parent=1 // pred_fallthru
      _
    // Predicated region
    $region10: #{tpu_custom_call.1} parent=1 // pred_check
      _
    $region11: #{tpu_custom_call.1} parent=1 // pred_check_branch
      %14 = sbr.rel (0) target = $region13
    $region12: #{tpu_custom_call.1} parent=1 // pred_region
      _
    $region13: #{tpu_custom_call.1} parent=1 // pred_fallthru
      _
    %v15 = vld [vmem:[%s0] sm:$0xff]
    %v16 = vld [vmem:[%s2] sm:$0x1]
    %v17 = vld [vmem:[%s1] sm:$0xff]
    %v18 = vld [vmem:[%s1 + $0x8] sm:$0xff]
    %v19 = vld [vmem:[%s1 + $0x10] sm:$0xff]
    %v20 = vld [vmem:[%s1 + $0x18] sm:$0xff]
    %v21 = vld [vmem:[%s1 + $0x20] sm:$0xff]
    %v22 = vld [vmem:[%s1 + $0x28] sm:$0xff]
    %vm23 = vcmask 392192
    %v25 = vsel %vm23, %v15, 0
    %27 = vmatprep.subr.mxu0 0.0
    %28 = vmatpush1.msra.mxu0 %v17
    %29 = vmatprep.subr.mxu0 0.0
    %30 = vmatpush1.msra.mxu0 %v18
    %31 = vmatprep.subr.mxu0 0.0
    %32 = vmatpush1.msra.mxu0 %v19
    %33 = vmatprep.subr.mxu0 0.0
    %34 = vmatpush1.msra.mxu0 %v20
    %35 = vmatprep.subr.mxu0 0.0
    %36 = vmatpush1.msra.mxu0 %v21
    %37 = vmatprep.subr.mxu0 0.0
    %38 = vmatpush1.msra.mxu0 %v22
    %39 = vmatprep.subr.mxu0 0.0
    %40 = vmatpush1.msra.mxu0 0.0
    %41 = vmatprep.subr.mxu0 0.0
    %42 = vmatpush1.msra.mxu0 0.0
    %43 = vmatprep.subr.mxu0 0.0
    %44 = vmatpush1.msra.mxu0 0.0
    %45 = vmatprep.subr.mxu0 0.0
    %46 = vmatpush1.msra.mxu0 0.0
    %47 = vmatprep.subr.mxu0 0.0
    %48 = vmatpush1.msra.mxu0 0.0
    %49 = vmatprep.subr.mxu0 0.0
    %50 = vmatpush1.msra.mxu0 0.0
    %51 = vmatprep.subr.mxu0 0.0
    %52 = vmatpush1.msra.mxu0 0.0
    %53 = vmatprep.subr.mxu0 0.0
    %54 = vmatpush1.msra.mxu0 0.0
    %55 = vmatprep.subr.mxu0 0.0
    %56 = vmatpush1.msra.mxu0 0.0
    %57 = vmatprep.subr.mxu0 0.0
    %58 = vmatpush1.msra.mxu0 0.0
    %59 = vmatprep.subr.mxu0 0.0
    %60 = vmatpush1.msra.mxu0 0.0
    %61 = vmatprep.subr.mxu0 0.0
    %62 = vmatpush1.msra.mxu0 0.0
    %63 = vmatprep.subr.mxu0 0.0
    %64 = vmatpush1.msra.mxu0 0.0
    %65 = vmatprep.subr.mxu0 0.0
    %66 = vmatpush1.msra.mxu0 0.0
    %67 = vmatprep.subr.mxu0 0.0
    %68 = vmatpush1.msra.mxu0 0.0
    %69 = vmatprep.subr.mxu0 0.0
    %70 = vmatpush1.msra.mxu0 0.0
    %71 = vmatprep.subr.mxu0 0.0
    %72 = vmatpush1.msra.mxu0 0.0
    %73 = vmatprep.subr.mxu0 0.0
    %74 = vmatpush1.msra.mxu0 0.0
    %75 = vmatprep.subr.mxu0 0.0
    %76 = vmatpush1.msra.mxu0 0.0
    %77 = vmatprep.subr.mxu0 0.0
    %78 = vmatpush1.msra.mxu0 0.0
    %79 = vmatprep.subr.mxu0 0.0
    %80 = vmatpush1.msra.mxu0 0.0
    %81 = vmatprep.subr.mxu0 0.0
    %82 = vmatpush1.msra.mxu0 0.0
    %83 = vmatprep.subr.mxu0 0.0
    %84 = vmatpush1.msra.mxu0 0.0
    %85 = vmatprep.subr.mxu0 0.0
    %86 = vmatpush1.msra.mxu0 0.0
    %87 = vmatprep.subr.mxu0 0.0
    %88 = vmatpush1.msra.mxu0 0.0
    %89 = vmatprep.subr.mxu0 0.0
    %90 = vmatpush1.msra.mxu0 0.0
    %91 = vmatprep.mubr.f32.mxu0 0.0
    %92 = vmatmul.mubr.f32.gmra.mrb[0].mxu0 %v25
    %v93 = vpop.f32.mrb[0].mxu0
    %v94 = vadd.f32 0.0, %v93
    %v95 = vpop.f32.mrb[0].mxu0
    %96 = vdwg.mxu0
    %v97 = vmax.f32 %v94, 0.0
    %v98 = vld [vmem:[%s1 + $0x30] sm:$0xff]
    %v99 = vld [vmem:[%s1 + $0x38] sm:$0xff]
    %v100 = vld [vmem:[%s1 + $0x40] sm:$0xff]
    %v101 = vld [vmem:[%s1 + $0x48] sm:$0xff]
    %v103 = vlaneseq
    %v104 = vshrl.u32 %v103, 7
    %v105 = vsub.s32 0, %v104
    %v106 = vrot.slane %v16, %v105
    %vm108 = vcmask 261120
    %v110 = vsel %vm108, %v97, 0
    %112 = vmatprep.subr.mxu0 0.0
    %113 = vmatpush1.msra.mxu0 %v98
    %114 = vmatprep.subr.mxu0 0.0
    %115 = vmatpush1.msra.mxu0 %v99
    %116 = vmatprep.subr.mxu0 0.0
    %117 = vmatpush1.msra.mxu0 %v100
    %118 = vmatprep.subr.mxu0 0.0
    %119 = vmatpush1.msra.mxu0 %v101
    %120 = vmatprep.subr.mxu0 0.0
    %121 = vmatpush1.msra.mxu0 0.0
    %122 = vmatprep.subr.mxu0 0.0
    %123 = vmatpush1.msra.mxu0 0.0
    %124 = vmatprep.subr.mxu0 0.0
    %125 = vmatpush1.msra.mxu0 0.0
    %126 = vmatprep.subr.mxu0 0.0
    %127 = vmatpush1.msra.mxu0 0.0
    %128 = vmatprep.subr.mxu0 0.0
    %129 = vmatpush1.msra.mxu0 0.0
    %130 = vmatprep.subr.mxu0 0.0
    %131 = vmatpush1.msra.mxu0 0.0
    %132 = vmatprep.subr.mxu0 0.0
    %133 = vmatpush1.msra.mxu0 0.0
    %134 = vmatprep.subr.mxu0 0.0
    %135 = vmatpush1.msra.mxu0 0.0
    %136 = vmatprep.subr.mxu0 0.0
    %137 = vmatpush1.msra.mxu0 0.0
    %138 = vmatprep.subr.mxu0 0.0
    %139 = vmatpush1.msra.mxu0 0.0
    %140 = vmatprep.subr.mxu0 0.0
    %141 = vmatpush1.msra.mxu0 0.0
    %142 = vmatprep.subr.mxu0 0.0
    %143 = vmatpush1.msra.mxu0 0.0
    %144 = vmatprep.subr.mxu0 0.0
    %145 = vmatpush1.msra.mxu0 0.0
    %146 = vmatprep.subr.mxu0 0.0
    %147 = vmatpush1.msra.mxu0 0.0
    %148 = vmatprep.subr.mxu0 0.0
    %149 = vmatpush1.msra.mxu0 0.0
    %150 = vmatprep.subr.mxu0 0.0
    %151 = vmatpush1.msra.mxu0 0.0
    %152 = vmatprep.subr.mxu0 0.0
    %153 = vmatpush1.msra.mxu0 0.0
    %154 = vmatprep.subr.mxu0 0.0
    %155 = vmatpush1.msra.mxu0 0.0
    %156 = vmatprep.subr.mxu0 0.0
    %157 = vmatpush1.msra.mxu0 0.0
    %158 = vmatprep.subr.mxu0 0.0
    %159 = vmatpush1.msra.mxu0 0.0
    %160 = vmatprep.subr.mxu0 0.0
    %161 = vmatpush1.msra.mxu0 0.0
    %162 = vmatprep.subr.mxu0 0.0
    %163 = vmatpush1.msra.mxu0 0.0
    %164 = vmatprep.subr.mxu0 0.0
    %165 = vmatpush1.msra.mxu0 0.0
    %166 = vmatprep.subr.mxu0 0.0
    %167 = vmatpush1.msra.mxu0 0.0
    %168 = vmatprep.subr.mxu0 0.0
    %169 = vmatpush1.msra.mxu0 0.0
    %170 = vmatprep.subr.mxu0 0.0
    %171 = vmatpush1.msra.mxu0 0.0
    %172 = vmatprep.subr.mxu0 0.0
    %173 = vmatpush1.msra.mxu0 0.0
    %174 = vmatprep.subr.mxu0 0.0
    %175 = vmatpush1.msra.mxu0 0.0
    %176 = vmatprep.mubr.f32.mxu0 0.0
    %177 = vmatmul.mubr.f32.gmra.mrb[0].mxu0 %v110
    %v178 = vpop.f32.mrb[0].mxu0
    %v179 = vadd.f32 %v106, %v178
    %v180 = vpop.f32.mrb[0].mxu0
    %181 = vdwg.mxu0
    %v182 = vmax.f32 %v179, 0.0
    %187 = vrot.lane.b32.xlu0 %v98, 96
    %v188 = vpop.permute.xlu0 %187
    %189 = vrot.lane.b32.xlu0 %v99, 96
    %v190 = vpop.permute.xlu0 %189
    %191 = vrot.lane.b32.xlu0 %v100, 96
    %v192 = vpop.permute.xlu0 %191
    %193 = vrot.lane.b32.xlu0 %v101, 96
    %v194 = vpop.permute.xlu0 %193
    %199 = vrot.lane.b32.xlu0 %v106, 96
    %v200 = vpop.permute.xlu0 %199
    %v203 = vsel %vm108, %v182, 0
    %205 = vmatprep.subr.mxu0 0.0
    %206 = vmatpush1.msra.mxu0 %v188
    %207 = vmatprep.subr.mxu0 0.0
    %208 = vmatpush1.msra.mxu0 %v190
    %209 = vmatprep.subr.mxu0 0.0
    %210 = vmatpush1.msra.mxu0 %v192
    %211 = vmatprep.subr.mxu0 0.0
    %212 = vmatpush1.msra.mxu0 %v194
    %213 = vmatprep.subr.mxu0 0.0
    %214 = vmatpush1.msra.mxu0 0.0
    %215 = vmatprep.subr.mxu0 0.0
    %216 = vmatpush1.msra.mxu0 0.0
    %217 = vmatprep.subr.mxu0 0.0
    %218 = vmatpush1.msra.mxu0 0.0
    %219 = vmatprep.subr.mxu0 0.0
    %220 = vmatpush1.msra.mxu0 0.0
    %221 = vmatprep.subr.mxu0 0.0
    %222 = vmatpush1.msra.mxu0 0.0
    %223 = vmatprep.subr.mxu0 0.0
    %224 = vmatpush1.msra.mxu0 0.0
    %225 = vmatprep.subr.mxu0 0.0
    %226 = vmatpush1.msra.mxu0 0.0
    %227 = vmatprep.subr.mxu0 0.0
    %228 = vmatpush1.msra.mxu0 0.0
    %229 = vmatprep.subr.mxu0 0.0
    %230 = vmatpush1.msra.mxu0 0.0
    %231 = vmatprep.subr.mxu0 0.0
    %232 = vmatpush1.msra.mxu0 0.0
    %233 = vmatprep.subr.mxu0 0.0
    %234 = vmatpush1.msra.mxu0 0.0
    %235 = vmatprep.subr.mxu0 0.0
    %236 = vmatpush1.msra.mxu0 0.0
    %237 = vmatprep.subr.mxu0 0.0
    %238 = vmatpush1.msra.mxu0 0.0
    %239 = vmatprep.subr.mxu0 0.0
    %240 = vmatpush1.msra.mxu0 0.0
    %241 = vmatprep.subr.mxu0 0.0
    %242 = vmatpush1.msra.mxu0 0.0
    %243 = vmatprep.subr.mxu0 0.0
    %244 = vmatpush1.msra.mxu0 0.0
    %245 = vmatprep.subr.mxu0 0.0
    %246 = vmatpush1.msra.mxu0 0.0
    %247 = vmatprep.subr.mxu0 0.0
    %248 = vmatpush1.msra.mxu0 0.0
    %249 = vmatprep.subr.mxu0 0.0
    %250 = vmatpush1.msra.mxu0 0.0
    %251 = vmatprep.subr.mxu0 0.0
    %252 = vmatpush1.msra.mxu0 0.0
    %253 = vmatprep.subr.mxu0 0.0
    %254 = vmatpush1.msra.mxu0 0.0
    %255 = vmatprep.subr.mxu0 0.0
    %256 = vmatpush1.msra.mxu0 0.0
    %257 = vmatprep.subr.mxu0 0.0
    %258 = vmatpush1.msra.mxu0 0.0
    %259 = vmatprep.subr.mxu0 0.0
    %260 = vmatpush1.msra.mxu0 0.0
    %261 = vmatprep.subr.mxu0 0.0
    %262 = vmatpush1.msra.mxu0 0.0
    %263 = vmatprep.subr.mxu0 0.0
    %264 = vmatpush1.msra.mxu0 0.0
    %265 = vmatprep.subr.mxu0 0.0
    %266 = vmatpush1.msra.mxu0 0.0
    %267 = vmatprep.subr.mxu0 0.0
    %268 = vmatpush1.msra.mxu0 0.0
    %269 = vmatprep.mubr.f32.mxu0 0.0
    %270 = vmatmul.mubr.f32.gmra.mrb[0].mxu0 %v203
    %v271 = vpop.f32.mrb[0].mxu0
    %v272 = vadd.f32 %v200, %v271
    %v273 = vpop.f32.mrb[0].mxu0
    %274 = vdwg.mxu0
    %v275 = vmul.f32 %v272, 1.442695
    %v276 = vpow.pop %v275
    %278 = vrot.lane.b32.xlu0 %v276, 32
    %v279 = vpop.permute.xlu0 %278
    %v281 = vmul.f32 %v15, %v279
    %283 = vrot.lane.b32.xlu0 %v272, 40
    %v284 = vpop.permute.xlu0 %283
    %v286 = vadd.f32 %v281, %v284
    %v287 = vld [vmem:[%s1 + $0x50] sm:$0xff]
    %289 = vrot.lane.b32.xlu0 %v286, 88
    %v290 = vpop.permute.xlu0 %289
    %292 = vrot.lane.b32.xlu0 %v94, 96
    %v293 = vpop.permute.xlu0 %292
    %vm295 = vcmask 64512
    %v296 = vsel %vm295, %v290, 0
    %298 = vmatprep.subr.mxu0 0.0
    %299 = vmatpush1.msra.mxu0 %v287
    %300 = vmatprep.subr.mxu0 0.0
    %301 = vmatpush1.msra.mxu0 0.0
    %302 = vmatprep.subr.mxu0 0.0
    %303 = vmatpush1.msra.mxu0 0.0
    %304 = vmatprep.subr.mxu0 0.0
    %305 = vmatpush1.msra.mxu0 0.0
    %306 = vmatprep.subr.mxu0 0.0
    %307 = vmatpush1.msra.mxu0 0.0
    %308 = vmatprep.subr.mxu0 0.0
    %309 = vmatpush1.msra.mxu0 0.0
    %310 = vmatprep.subr.mxu0 0.0
    %311 = vmatpush1.msra.mxu0 0.0
    %312 = vmatprep.subr.mxu0 0.0
    %313 = vmatpush1.msra.mxu0 0.0
    %314 = vmatprep.subr.mxu0 0.0
    %315 = vmatpush1.msra.mxu0 0.0
    %316 = vmatprep.subr.mxu0 0.0
    %317 = vmatpush1.msra.mxu0 0.0
    %318 = vmatprep.subr.mxu0 0.0
    %319 = vmatpush1.msra.mxu0 0.0
    %320 = vmatprep.subr.mxu0 0.0
    %321 = vmatpush1.msra.mxu0 0.0
    %322 = vmatprep.subr.mxu0 0.0
    %323 = vmatpush1.msra.mxu0 0.0
    %324 = vmatprep.subr.mxu0 0.0
    %325 = vmatpush1.msra.mxu0 0.0
    %326 = vmatprep.subr.mxu0 0.0
    %327 = vmatpush1.msra.mxu0 0.0
    %328 = vmatprep.subr.mxu0 0.0
    %329 = vmatpush1.msra.mxu0 0.0
    %330 = vmatprep.subr.mxu0 0.0
    %331 = vmatpush1.msra.mxu0 0.0
    %332 = vmatprep.subr.mxu0 0.0
    %333 = vmatpush1.msra.mxu0 0.0
    %334 = vmatprep.subr.mxu0 0.0
    %335 = vmatpush1.msra.mxu0 0.0
    %336 = vmatprep.subr.mxu0 0.0
    %337 = vmatpush1.msra.mxu0 0.0
    %338 = vmatprep.subr.mxu0 0.0
    %339 = vmatpush1.msra.mxu0 0.0
    %340 = vmatprep.subr.mxu0 0.0
    %341 = vmatpush1.msra.mxu0 0.0
    %342 = vmatprep.subr.mxu0 0.0
    %343 = vmatpush1.msra.mxu0 0.0
    %344 = vmatprep.subr.mxu0 0.0
    %345 = vmatpush1.msra.mxu0 0.0
    %346 = vmatprep.subr.mxu0 0.0
    %347 = vmatpush1.msra.mxu0 0.0
    %348 = vmatprep.subr.mxu0 0.0
    %349 = vmatpush1.msra.mxu0 0.0
    %350 = vmatprep.subr.mxu0 0.0
    %351 = vmatpush1.msra.mxu0 0.0
    %352 = vmatprep.subr.mxu0 0.0
    %353 = vmatpush1.msra.mxu0 0.0
    %354 = vmatprep.subr.mxu0 0.0
    %355 = vmatpush1.msra.mxu0 0.0
    %356 = vmatprep.subr.mxu0 0.0
    %357 = vmatpush1.msra.mxu0 0.0
    %358 = vmatprep.subr.mxu0 0.0
    %359 = vmatpush1.msra.mxu0 0.0
    %360 = vmatprep.subr.mxu0 0.0
    %361 = vmatpush1.msra.mxu0 0.0
    %362 = vmatprep.mubr.f32.mxu0 0.0
    %363 = vmatmul.mubr.f32.gmra.mrb[0].mxu0 %v296
    %v364 = vpop.f32.mrb[0].mxu0
    %v365 = vadd.f32 %v293, %v364
    %v366 = vpop.f32.mrb[0].mxu0
    %367 = vdwg.mxu0
    %v368 = vmax.f32 %v365, 0.0
    %v369 = vld [vmem:[%s1 + $0x58] sm:$0xff]
    %v370 = vld [vmem:[%s1 + $0x60] sm:$0xff]
    %v371 = vld [vmem:[%s1 + $0x68] sm:$0xff]
    %v372 = vld [vmem:[%s1 + $0x70] sm:$0xff]
    %373 = vrot.lane.b32.xlu0 %v106, 64
    %v374 = vpop.permute.xlu0 %373
    %v377 = vsel %vm108, %v368, 0
    %379 = vmatprep.subr.mxu0 0.0
    %380 = vmatpush1.msra.mxu0 %v369
    %381 = vmatprep.subr.mxu0 0.0
    %382 = vmatpush1.msra.mxu0 %v370
    %383 = vmatprep.subr.mxu0 0.0
    %384 = vmatpush1.msra.mxu0 %v371
    %385 = vmatprep.subr.mxu0 0.0
    %386 = vmatpush1.msra.mxu0 %v372
    %387 = vmatprep.subr.mxu0 0.0
    %388 = vmatpush1.msra.mxu0 0.0
    %389 = vmatprep.subr.mxu0 0.0
    %390 = vmatpush1.msra.mxu0 0.0
    %391 = vmatprep.subr.mxu0 0.0
    %392 = vmatpush1.msra.mxu0 0.0
    %393 = vmatprep.subr.mxu0 0.0
    %394 = vmatpush1.msra.mxu0 0.0
    %395 = vmatprep.subr.mxu0 0.0
    %396 = vmatpush1.msra.mxu0 0.0
    %397 = vmatprep.subr.mxu0 0.0
    %398 = vmatpush1.msra.mxu0 0.0
    %399 = vmatprep.subr.mxu0 0.0
    %400 = vmatpush1.msra.mxu0 0.0
    %401 = vmatprep.subr.mxu0 0.0
    %402 = vmatpush1.msra.mxu0 0.0
    %403 = vmatprep.subr.mxu0 0.0
    %404 = vmatpush1.msra.mxu0 0.0
    %405 = vmatprep.subr.mxu0 0.0
    %406 = vmatpush1.msra.mxu0 0.0
    %407 = vmatprep.subr.mxu0 0.0
    %408 = vmatpush1.msra.mxu0 0.0
    %409 = vmatprep.subr.mxu0 0.0
    %410 = vmatpush1.msra.mxu0 0.0
    %411 = vmatprep.subr.mxu0 0.0
    %412 = vmatpush1.msra.mxu0 0.0
    %413 = vmatprep.subr.mxu0 0.0
    %414 = vmatpush1.msra.mxu0 0.0
    %415 = vmatprep.subr.mxu0 0.0
    %416 = vmatpush1.msra.mxu0 0.0
    %417 = vmatprep.subr.mxu0 0.0
    %418 = vmatpush1.msra.mxu0 0.0
    %419 = vmatprep.subr.mxu0 0.0
    %420 = vmatpush1.msra.mxu0 0.0
    %421 = vmatprep.subr.mxu0 0.0
    %422 = vmatpush1.msra.mxu0 0.0
    %423 = vmatprep.subr.mxu0 0.0
    %424 = vmatpush1.msra.mxu0 0.0
    %425 = vmatprep.subr.mxu0 0.0
    %426 = vmatpush1.msra.mxu0 0.0
    %427 = vmatprep.subr.mxu0 0.0
    %428 = vmatpush1.msra.mxu0 0.0
    %429 = vmatprep.subr.mxu0 0.0
    %430 = vmatpush1.msra.mxu0 0.0
    %431 = vmatprep.subr.mxu0 0.0
    %432 = vmatpush1.msra.mxu0 0.0
    %433 = vmatprep.subr.mxu0 0.0
    %434 = vmatpush1.msra.mxu0 0.0
    %435 = vmatprep.subr.mxu0 0.0
    %436 = vmatpush1.msra.mxu0 0.0
    %437 = vmatprep.subr.mxu0 0.0
    %438 = vmatpush1.msra.mxu0 0.0
    %439 = vmatprep.subr.mxu0 0.0
    %440 = vmatpush1.msra.mxu0 0.0
    %441 = vmatprep.subr.mxu0 0.0
    %442 = vmatpush1.msra.mxu0 0.0
    %443 = vmatprep.mubr.f32.mxu0 0.0
    %444 = vmatmul.mubr.f32.gmra.mrb[0].mxu0 %v377
    %v445 = vpop.f32.mrb[0].mxu0
    %v446 = vadd.f32 %v374, %v445
    %v447 = vpop.f32.mrb[0].mxu0
    %448 = vdwg.mxu0
    %v449 = vmax.f32 %v446, 0.0
    %454 = vrot.lane.b32.xlu0 %v369, 96
    %v455 = vpop.permute.xlu0 %454
    %456 = vrot.lane.b32.xlu0 %v370, 96
    %v457 = vpop.permute.xlu0 %456
    %458 = vrot.lane.b32.xlu0 %v371, 96
    %v459 = vpop.permute.xlu0 %458
    %460 = vrot.lane.b32.xlu0 %v372, 96
    %v461 = vpop.permute.xlu0 %460
    %466 = vrot.lane.b32.xlu0 %v106, 32
    %v467 = vpop.permute.xlu0 %466
    %v470 = vsel %vm108, %v449, 0
    %472 = vmatprep.subr.mxu0 0.0
    %473 = vmatpush1.msra.mxu0 %v455
    %474 = vmatprep.subr.mxu0 0.0
    %475 = vmatpush1.msra.mxu0 %v457
    %476 = vmatprep.subr.mxu0 0.0
    %477 = vmatpush1.msra.mxu0 %v459
    %478 = vmatprep.subr.mxu0 0.0
    %479 = vmatpush1.msra.mxu0 %v461
    %480 = vmatprep.subr.mxu0 0.0
    %481 = vmatpush1.msra.mxu0 0.0
    %482 = vmatprep.subr.mxu0 0.0
    %483 = vmatpush1.msra.mxu0 0.0
    %484 = vmatprep.subr.mxu0 0.0
    %485 = vmatpush1.msra.mxu0 0.0
    %486 = vmatprep.subr.mxu0 0.0
    %487 = vmatpush1.msra.mxu0 0.0
    %488 = vmatprep.subr.mxu0 0.0
    %489 = vmatpush1.msra.mxu0 0.0
    %490 = vmatprep.subr.mxu0 0.0
    %491 = vmatpush1.msra.mxu0 0.0
    %492 = vmatprep.subr.mxu0 0.0
    %493 = vmatpush1.msra.mxu0 0.0
    %494 = vmatprep.subr.mxu0 0.0
    %495 = vmatpush1.msra.mxu0 0.0
    %496 = vmatprep.subr.mxu0 0.0
    %497 = vmatpush1.msra.mxu0 0.0
    %498 = vmatprep.subr.mxu0 0.0
    %499 = vmatpush1.msra.mxu0 0.0
    %500 = vmatprep.subr.mxu0 0.0
    %501 = vmatpush1.msra.mxu0 0.0
    %502 = vmatprep.subr.mxu0 0.0
    %503 = vmatpush1.msra.mxu0 0.0
    %504 = vmatprep.subr.mxu0 0.0
    %505 = vmatpush1.msra.mxu0 0.0
    %506 = vmatprep.subr.mxu0 0.0
    %507 = vmatpush1.msra.mxu0 0.0
    %508 = vmatprep.subr.mxu0 0.0
    %509 = vmatpush1.msra.mxu0 0.0
    %510 = vmatprep.subr.mxu0 0.0
    %511 = vmatpush1.msra.mxu0 0.0
    %512 = vmatprep.subr.mxu0 0.0
    %513 = vmatpush1.msra.mxu0 0.0
    %514 = vmatprep.subr.mxu0 0.0
    %515 = vmatpush1.msra.mxu0 0.0
    %516 = vmatprep.subr.mxu0 0.0
    %517 = vmatpush1.msra.mxu0 0.0
    %518 = vmatprep.subr.mxu0 0.0
    %519 = vmatpush1.msra.mxu0 0.0
    %520 = vmatprep.subr.mxu0 0.0
    %521 = vmatpush1.msra.mxu0 0.0
    %522 = vmatprep.subr.mxu0 0.0
    %523 = vmatpush1.msra.mxu0 0.0
    %524 = vmatprep.subr.mxu0 0.0
    %525 = vmatpush1.msra.mxu0 0.0
    %526 = vmatprep.subr.mxu0 0.0
    %527 = vmatpush1.msra.mxu0 0.0
    %528 = vmatprep.subr.mxu0 0.0
    %529 = vmatpush1.msra.mxu0 0.0
    %530 = vmatprep.subr.mxu0 0.0
    %531 = vmatpush1.msra.mxu0 0.0
    %532 = vmatprep.subr.mxu0 0.0
    %533 = vmatpush1.msra.mxu0 0.0
    %534 = vmatprep.subr.mxu0 0.0
    %535 = vmatpush1.msra.mxu0 0.0
    %536 = vmatprep.mubr.f32.mxu0 0.0
    %537 = vmatmul.mubr.f32.gmra.mrb[0].mxu0 %v470
    %v538 = vpop.f32.mrb[0].mxu0
    %v539 = vadd.f32 %v467, %v538
    %v540 = vpop.f32.mrb[0].mxu0
    %541 = vdwg.mxu0
    %542 = vrot.lane.b32.xlu0 %v272, 32
    %v543 = vpop.permute.xlu0 %542
    %545 = vrot.lane.b32.xlu0 %v286, 8
    %v546 = vpop.permute.xlu0 %545
    %v548 = vsel %vm108, %v539, %v543
    %vm549 = vcmask 326656
    %v550 = vsel %vm549, %v548, %v543
    %v551 = vsel %vm23, %v550, %v546
    %vm552 = vcmask 457728
    %v553 = vsel %vm552, %v551, 0.0
    %554 = vst [vmem:[#allocation2] sm:$0xff] %v553
    // Predicated region
    $region14: #{tpu_custom_call.1} parent=1 // pred_check
      _
    $region15: #{tpu_custom_call.1} parent=1 // pred_check_branch
      %556 = sbr.rel (0) target = $region17
    $region16: #{tpu_custom_call.1} parent=1 // pred_region
      %s558 = ssub.s32 128, 128
      %559 = vsyncadd [#allocation3], %s558
      %s561 = sshll.u32 [#allocation2], 4
      %s562 = int_to_ptr.vmem [resolvable:$true] %s561
      %564 = dma.vmem_to_hbm [thread:$0]  %s562, 128, %s3, [#allocation3]
    $region17: #{tpu_custom_call.1} parent=1 // pred_fallthru
      _
    // Predicated region
    $region18: #{tpu_custom_call.1} parent=1 // pred_check
      _
    $region19: #{tpu_custom_call.1} parent=1 // pred_check_branch
      %566 = sbr.rel (0) target = $region21
    $region20: #{tpu_custom_call.1} parent=1 // pred_region
      %567 = dma.done [#allocation3], 128
    $region21: #{tpu_custom_call.1} parent=1 // pred_fallthru
      _
    %568 = vsyncpa [#allocation3], 1

</llo_original>
